<compile_context>
chip_gen: v6e
topology: v6e:2x2x1
jax: 0.10.0
libtpu: 0.0.40
codegen_flags: <defaults>
</compile_context>

<pallas_src>
import functools

import jax
import jax.numpy as jnp
from jax.experimental import pallas as pl
from jax.experimental.pallas import tpu as pltpu


def skip_forward_noop(x):
    """Zero-cost identity: Skip_ does no computation, just return the input.

    This is the preferred production path (no kernel, no HBM traffic)."""
    return x


def _hbm_copy_kernel(chunk_bounds, x_ref, o_ref, sems):
    """Direct HBM->HBM copy: start all chunk DMAs, then wait for all of them.

    `chunk_bounds` is a static tuple of (lo, hi) row ranges, so the body is
    fully unrolled at trace time; keeping several DMAs in flight lets the DMA
    engines stream the tensor at HBM bandwidth with no VMEM round trip."""
    copies = [
        pltpu.make_async_copy(x_ref.at[lo:hi], o_ref.at[lo:hi], sems.at[i])
        for i, (lo, hi) in enumerate(chunk_bounds)
    ]
    for c in copies:
        c.start()
    for c in copies:
        c.wait()


_MAX_LANE_WIDTH = 8192   # largest 128-multiple column width to try
_MAX_CHUNKS = 4          # DMAs kept in flight for the chunked path


def _choose_cols(total):
    """Largest multiple of 128 (<= _MAX_LANE_WIDTH) that divides `total`."""
    c = min(_MAX_LANE_WIDTH, total)
    c -= c % 128
    while c >= 128:
        if total % c == 0:
            return c
        c -= 128
    return None


def skip_forward(x, *, donate_input=False, max_chunks=_MAX_CHUNKS):
    """Identity forward of Skip_.

    donate_input=True (or skip_forward_noop) is the zero-cost path: the output
    would be bit-identical and live in the same buffer, so the copy is pure
    waste and we simply return the input.

    Otherwise a fresh output buffer is produced with a chunked, direct
    HBM->HBM DMA (no VMEM pipeline, no grid)."""
    if donate_input:
        # Aliased copy of identical contents == no-op; skip all HBM traffic.
        return x

    orig_shape = x.shape
    total = int(x.size)
    if total == 0:
        return x
    itemsize = jnp.dtype(x.dtype).itemsize

    # Form a 2-D slab purely so we have a leading axis to chunk along.  DMA
    # HBM->HBM has no (8,128)/lane constraints, so odd sizes just become a
    # single whole-tensor copy of a (1, total) view.
    cols = _choose_cols(total)
    if cols is None:
        rows, cols = 1, total
    else:
        rows = total // cols
    x2d = x.reshape(rows, cols)

    # Split rows into up to `max_chunks` near-equal contiguous chunks so a few
    # DMAs overlap; chunk bounds are static Python ints.
    n_chunks = max(1, min(max_chunks, rows))
    base, rem = divmod(rows, n_chunks)
    bounds = []
    lo = 0
    for i in range(n_chunks):
        hi = lo + base + (1 if i < rem else 0)
        bounds.append((lo, hi))
        lo = hi

    kernel = functools.partial(_hbm_copy_kernel, tuple(bounds))

    out2d = pl.pallas_call(
        kernel,
        out_shape=jax.ShapeDtypeStruct((rows, cols), x2d.dtype),
        in_specs=[pl.BlockSpec(memory_space=pl.ANY)],
        out_specs=pl.BlockSpec(memory_space=pl.ANY),
        scratch_shapes=[pltpu.SemaphoreType.DMA((n_chunks,))],
        cost_estimate=pl.CostEstimate(
            flops=0,
            transcendentals=0,
            bytes_accessed=2 * total * itemsize,
        ),
    )(x2d)
    return out2d.reshape(orig_shape)


if __name__ == "__main__":
    key = jax.random.PRNGKey(0)

    # 1) Small NCHW feature map — the canonical module input (single DMA).
    x1 = jax.random.normal(key, (2, 4, 16, 16), dtype=jnp.float32)
    y1 = jax.block_until_ready(skip_forward(x1))
    assert y1.shape == x1.shape and y1.dtype == x1.dtype
    assert bool(jnp.all(y1 == x1)), "Skip_ identity mismatch (test 1)"

    # 2) Exercise the multi-chunk path: (5, 8192) slab -> 4 DMAs in flight.
    k2 = jax.random.fold_in(key, 1)
    x2 = jax.random.normal(k2, (5, 8, 32, 32), dtype=jnp.float32)
    y2 = jax.block_until_ready(skip_forward(x2))
    assert y2.shape == x2.shape and y2.dtype == x2.dtype
    assert bool(jnp.all(y2 == x2)), "Skip_ identity mismatch (test 2)"

    # 3) bf16 path.
    k3 = jax.random.fold_in(key, 2)
    x3 = jax.random.normal(k3, (2, 8, 16, 16), dtype=jnp.bfloat16)
    y3 = jax.block_until_ready(skip_forward(x3))
    assert y3.shape == x3.shape and y3.dtype == x3.dtype
    assert bool(jnp.all(y3 == x3)), "Skip_ identity mismatch (test 3)"

    # 4) Odd element count (not a multiple of 128): whole-tensor HBM->HBM DMA,
    #    no VMEM footprint, no OOM cliff.
    k4 = jax.random.fold_in(key, 3)
    x4 = jax.random.normal(k4, (3, 7, 11), dtype=jnp.float32)
    y4 = jax.block_until_ready(skip_forward(x4))
    assert y4.shape == x4.shape and y4.dtype == x4.dtype
    assert bool(jnp.all(y4 == x4)), "Skip_ identity mismatch (test 4)"

    # 5) Zero-cost paths: noop and donate_input short-circuit to the input.
    assert skip_forward_noop(x1) is x1
    assert skip_forward(x1, donate_input=True) is x1

    print("KERNEL_OK")
</pallas_src>

<mosaic_0001>
module attributes {stable_mosaic.version = 11 : i64} {
  func.func @_hbm_copy_kernel(%arg0: memref<1x2048xf32, #tpu.memory_space<any>>, %arg1: memref<1x2048xf32, #tpu.memory_space<any>>, %arg2: memref<1x!tpu.dma_semaphore, #tpu.memory_space<semaphore_mem>>) attributes {dimension_semantics = [], scalar_prefetch = 0 : i64, scratch_operands = 1 : i64, tpu.core_type = #tpu.core_type<tc>} {
    %c0_i32 = arith.constant 0 : i32
    %c0_i32_0 = arith.constant 0 : i32
    %c0_i32_1 = arith.constant 0 : i32
    %0 = tpu.memref_slice %arg0[%c0_i32_0, %c0_i32_1] : memref<1x2048xf32, #tpu.memory_space<any>> -> memref<1x2048xf32, #tpu.memory_space<any>>
    %c0_i32_2 = arith.constant 0 : i32
    %c0_i32_3 = arith.constant 0 : i32
    %1 = tpu.memref_slice %arg1[%c0_i32_2, %c0_i32_3] : memref<1x2048xf32, #tpu.memory_space<any>> -> memref<1x2048xf32, #tpu.memory_space<any>>
    %2 = tpu.memref_slice %arg2[%c0_i32] : memref<1x!tpu.dma_semaphore, #tpu.memory_space<semaphore_mem>> -> memref<1x!tpu.dma_semaphore, #tpu.memory_space<semaphore_mem>>
    %3 = tpu.memref_squeeze %2 : memref<1x!tpu.dma_semaphore, #tpu.memory_space<semaphore_mem>> -> memref<!tpu.dma_semaphore, #tpu.memory_space<semaphore_mem>>
    tpu.enqueue_dma source(%0 : memref<1x2048xf32, #tpu.memory_space<any>>) target(%1 : memref<1x2048xf32, #tpu.memory_space<any>>) target_semaphore(%3 : memref<!tpu.dma_semaphore, #tpu.memory_space<semaphore_mem>>)
    %c0_i32_4 = arith.constant 0 : i32
    %c0_i32_5 = arith.constant 0 : i32
    %c0_i32_6 = arith.constant 0 : i32
    %4 = tpu.memref_slice %arg0[%c0_i32_5, %c0_i32_6] : memref<1x2048xf32, #tpu.memory_space<any>> -> memref<1x2048xf32, #tpu.memory_space<any>>
    %c0_i32_7 = arith.constant 0 : i32
    %c0_i32_8 = arith.constant 0 : i32
    %5 = tpu.memref_slice %arg1[%c0_i32_7, %c0_i32_8] : memref<1x2048xf32, #tpu.memory_space<any>> -> memref<1x2048xf32, #tpu.memory_space<any>>
    %6 = tpu.memref_slice %arg2[%c0_i32_4] : memref<1x!tpu.dma_semaphore, #tpu.memory_space<semaphore_mem>> -> memref<1x!tpu.dma_semaphore, #tpu.memory_space<semaphore_mem>>
    %7 = tpu.memref_squeeze %6 : memref<1x!tpu.dma_semaphore, #tpu.memory_space<semaphore_mem>> -> memref<!tpu.dma_semaphore, #tpu.memory_space<semaphore_mem>>
    tpu.wait_dma2 semaphore(%7 : memref<!tpu.dma_semaphore, #tpu.memory_space<semaphore_mem>>) src(%4 : memref<1x2048xf32, #tpu.memory_space<any>>) dst(%5 : memref<1x2048xf32, #tpu.memory_space<any>>)
    return
  }
}

</mosaic_0001>

<llo_original>
// kernel: tpu_custom_call.1
$region0: #{tpu_custom_call.1}
  #allocation0 [shape = 'u32[]', space=smem, size = 0x4, offset = 0x4, fixed_abs, tag = 'smem constant byte address 0x4 - core index']
  #allocation1 [shape = 'u32[144,128]{1,0:T(1,128)}', space=vmem, size = 0x12000, scoped, tag = 'internal scratch']
  #allocation2 [shape = 's32[1]{0}', space=sflag, size = 0x4, scoped, tag = 'scratch operand']
  #allocation3 [shape = 's32[]', space=sflag, size = 0x4, offset = 0, fixed_abs, tag = 'sflag constant byte address 0x0 - dummy sync flag']
  #allocation4 [shape = 'u32[0]{0}', space=smem, size = 0, offset = 0, fixed_abs, tag = 'smem constant byte address 0x0 - null']
  %s0 = inlined_call_operand.hbm [shape: f32[1,2048], index: 0, kind: input, shape index: {}]
  %s1 = inlined_call_operand.hbm [shape: f32[1,2048], index: 1, kind: output, shape index: {}]
  %s2 = sld [smem:[#allocation0]]
  $region2: #{tpu_custom_call.1} parent=0
    _
  %s4 = ssub.s32 1, %s2
  %s5 = scalar_select 0, %s4, %s2
  %s7 = sshll.u32 1, 14
  %s8 = sxor.u32 4294967295, %s7
  %12 = dma.general %s0, 256, %s1, [#allocation2], 131072, [#allocation4], 0, 0
  %s13 = smul.u32 1, 16
  %s14 = sshll.u32 %s13, 4
  %15 = dma.done [#allocation2], %s14
  %16 = vsyncmov [#allocation2]
  %s17 = vpop.sfrf %16
  %p18 = scmp.eq.s32.totalorder %s17, 0
  %p19 = pneg %p18
  %21 = shalt.err (%p19)

</llo_original>
